<compile_context>
chip_gen: v7x
topology: tpu7x:2x2x1
jax: 0.10.0
libtpu: 0.0.40
codegen_flags: <defaults>
</compile_context>

<pallas_src>
import functools
import math

import jax
import jax.numpy as jnp
from jax import lax  # noqa: F401
from jax.experimental import pallas as pl
from jax.experimental.pallas import tpu as pltpu


_LANE = 128      # vreg lane width (last dim)
_SUBLANE = 8     # f32 sublane count (second-to-last dim)


def _round_up(n, m):
    return ((n + m - 1) // m) * m


# ----------------------------------------------------------------------------
# Pallas kernel: the entire MLP fused into one call
# ----------------------------------------------------------------------------
def _fused_mlp_kernel(*refs, acts, douts):
    """refs = (x_ref, w0_ref, w1_ref, ..., b_stack_ref, o_ref).

    Weights are (Din, Dout) in native width except the final layer, whose
    Dout is lane-padded (zero columns).  The bias stack row of the final
    softmax layer carries -1e30 in the padded lanes, so softmax needs no
    explicit mask: exp(-1e30 - m) == 0.
    """
    x_ref = refs[0]
    b_ref = refs[-2]
    o_ref = refs[-1]
    w_refs = refs[1:-2]

    h = x_ref[...]
    for i, (act, dw) in enumerate(zip(acts, douts)):
        w = w_refs[i][...]
        b = b_ref[i:i + 1, 0:dw]                    # (1, dw) static ref slice
        # MXU matmul with f32 accumulation, bias broadcast on the VPU.
        y = jnp.dot(h, w, preferred_element_type=jnp.float32) + b
        if act == "relu":
            y = jnp.maximum(y, 0.0)
        elif act == "softmax":
            # nn.Softmax() on 2-D input -> softmax over dim=1 (features).
            # Padded lanes (if any) already hold -1e30 via the bias fold.
            m = jnp.max(y, axis=-1, keepdims=True)
            e = jnp.exp(y - m)
            s = jnp.sum(e, axis=-1, keepdims=True)
            r = pl.reciprocal(s, approx=True)       # EUP vrcp
            r = r * (2.0 - s * r)                   # Newton step -> ~f32 exact
            y = e * r
        # 'linear' -> identity
        h = y
    o_ref[...] = h.astype(o_ref.dtype)


def fused_mlp(x, weights, bias_stack, acts, douts, *, tile_b):
    """Single pallas_call running every layer; only the final output hits HBM."""
    B_pad, din = x.shape
    out_w = douts[-1]
    n_tiles = B_pad // tile_b

    # --- VMEM budget guard (double-buffered operands) ------------------------
    est = 2 * 4 * (tile_b * din + tile_b * out_w)                 # x + out tiles
    est += 2 * 4 * sum(int(w.size) for w in weights)              # weights
    est += 2 * 4 * int(bias_stack.size)                           # bias stack
    if est > 48 * 1024 * 1024:
        # TODO(synk): fall back to a per-layer K/N-tiled pipeline for configs
        # whose weights do not fit VMEM in one fused block.
        raise NotImplementedError("Network too large for fused single-block kernel")
    vmem_limit = None
    if est > 24 * 1024 * 1024:
        vmem_limit = int(min(est + (8 << 20), 56 << 20))

    flat_inputs = [x]
    in_specs = [pl.BlockSpec((tile_b, din), lambda i: (i, 0))]
    for w in weights:
        flat_inputs.append(w)
        in_specs.append(pl.BlockSpec(w.shape, lambda i: (0, 0)))   # broadcast
    flat_inputs.append(bias_stack)
    in_specs.append(pl.BlockSpec(bias_stack.shape, lambda i: (0, 0)))

    kernel = functools.partial(
        _fused_mlp_kernel, acts=tuple(acts), douts=tuple(douts))

    return pl.pallas_call(
        kernel,
        out_shape=jax.ShapeDtypeStruct((B_pad, out_w), jnp.float32),
        grid=(n_tiles,),
        in_specs=in_specs,
        out_specs=pl.BlockSpec((tile_b, out_w), lambda i: (i, 0)),
        compiler_params=pltpu.CompilerParams(
            dimension_semantics=("parallel",),
            vmem_limit_bytes=vmem_limit),
    )(*flat_inputs)


# ----------------------------------------------------------------------------
# Network: mirrors the JSON-configured PyTorch module
# ----------------------------------------------------------------------------
class Network:
    def __init__(self, json_file, key):
        self._l = json_file["config"]["layers"]
        self._name = json_file["config"]["name"]
        self._hparams = json_file["config"]["hyperparameters"]

        self.params = []     # original (W, b) -- PyTorch Linear layout (for ref)
        self.acts = []       # activation name per Dense layer
        self.douts = []      # stored output width per layer (final lane-padded)
        weights = []         # pre-transposed (Din, Dout) kernel operands

        n_layers = len(self._l)
        for idx, layer in enumerate(self._l):
            class_name = layer["class_name"]
            input_shape = layer["config"]["input_shape"]
            units = layer["config"]["units"]
            activation = layer["config"]["activation"]
            if class_name != "Dense":
                # TODO(synk): Conv2d branch exists in the reference module, but its
                # forward always flattens x first, so only Dense configs are valid.
                raise NotImplementedError("Only Dense layers are supported")

            key, kw, kb = jax.random.split(key, 3)
            # Deterministic init mimicking nn.Linear's uniform(-1/sqrt(fan_in), ...)
            bound = 1.0 / math.sqrt(float(input_shape))
            w = jax.random.uniform(kw, (units, input_shape), jnp.float32, -bound, bound)
            b = jax.random.uniform(kb, (units,), jnp.float32, -bound, bound)
            self.params.append((w, b))
            self.acts.append(activation)

            is_last = idx == n_layers - 1
            # Only the FINAL layer's output is lane-padded (lane-dense HBM store);
            # intermediates stay native width in vregs.
            dstore = _round_up(units, _LANE) if is_last else units
            self.douts.append(dstore)

            wt = jnp.asarray(w.T)                          # (Din, Dout), native
            if dstore != units:
                wt = jnp.pad(wt, ((0, 0), (0, dstore - units)))
            weights.append(wt)

        # All biases stacked into one (n_layers, max_width) operand.
        bias_w = max(self.douts)
        b_stack = jnp.zeros((n_layers, bias_w), jnp.float32)
        for i, ((_, b), act, dstore) in enumerate(zip(self.params, self.acts, self.douts)):
            units = b.shape[0]
            b_stack = b_stack.at[i, :units].set(b)
            if act == "softmax" and dstore > units:
                # Fold the softmax padding mask into the bias: padded logits get
                # -1e30 so exp() underflows to exactly 0 -- no in-kernel mask.
                b_stack = b_stack.at[i, units:dstore].set(-1e30)

        self.weights = weights
        self.bias_stack = b_stack
        self._out_dim = self.params[-1][0].shape[0]

        # Compile the whole forward once: reshape, pad, fused kernel, slice.
        self._fwd = jax.jit(self._forward_impl)

    def _forward_impl(self, x):
        B = x.shape[0]
        x = x.reshape(B, -1).astype(jnp.float32)           # x.view(x.size()[0], -1)
        B_pad = _round_up(max(B, _SUBLANE), _SUBLANE)
        tile_b = B_pad if B_pad <= 512 else 256             # batch tile (grid axis)
        B_pad = _round_up(B_pad, tile_b)
        if B_pad != B:
            x = jnp.pad(x, ((0, B_pad - B), (0, 0)))
        out_pad = fused_mlp(x, self.weights, self.bias_stack, self.acts, self.douts,
                            tile_b=tile_b)
        out = out_pad[:B, :self._out_dim]
        if B == 1:                                          # x.squeeze(0)
            out = out[0]
        return out

    def forward(self, x):
        return self._fwd(x)


# ----------------------------------------------------------------------------
# Pure-JAX reference for correctness checking
# ----------------------------------------------------------------------------
def reference_forward(net, x):
    x = x.reshape(x.shape[0], -1).astype(jnp.float32)
    for (w, b), act in zip(net.params, net.acts):
        x = x @ w.T + b
        if act == "relu":
            x = jnp.maximum(x, 0.0)
        elif act == "softmax":
            x = jax.nn.softmax(x, axis=1)
    if x.shape[0] == 1:
        x = x[0]
    return x


if __name__ == "__main__":
    # Synthetic JSON config (what the module's __init__ consumes).
    json_file = {
        "config": {
            "name": "synthetic_mlp",
            "hyperparameters": {"lr": 1e-3},
            "layers": [
                {"class_name": "Dense",
                 "config": {"input_shape": 64, "units": 32, "activation": "relu"}},
                {"class_name": "Dense",
                 "config": {"input_shape": 32, "units": 32, "activation": "relu"}},
                {"class_name": "Dense",
                 "config": {"input_shape": 32, "units": 8, "activation": "softmax"}},
            ],
        }
    }

    key = jax.random.PRNGKey(0)
    key, kparams, kx = jax.random.split(key, 3)

    net = Network(json_file, kparams)

    # Input: NCHW (B=2, C=4, H=4, W=4) -> flattened feature dim = 64.
    x = jax.random.normal(kx, (2, 4, 4, 4), jnp.float32)

    out = net.forward(x)
    out = jax.block_until_ready(out)

    ref = reference_forward(net, x)
    assert out.shape == ref.shape, (out.shape, ref.shape)
    assert jnp.allclose(out, ref, atol=1e-5, rtol=1e-5), "mismatch vs reference"

    print("KERNEL_OK")
</pallas_src>

<mosaic_0001>
module attributes {stable_mosaic.version = 11 : i64} {
  func.func @_fused_mlp_kernel(%arg0: i32, %arg1: memref<8x64xf32, #tpu.memory_space<vmem>>, %arg2: memref<64x32xf32, #tpu.memory_space<vmem>>, %arg3: memref<32x32xf32, #tpu.memory_space<vmem>>, %arg4: memref<32x128xf32, #tpu.memory_space<vmem>>, %arg5: memref<3x128xf32, #tpu.memory_space<vmem>>, %arg6: memref<8x128xf32, #tpu.memory_space<vmem>>) attributes {dimension_semantics = [#tpu.dimension_semantics<parallel>], iteration_bounds = array<i64: 1>, scalar_prefetch = 0 : i64, scratch_operands = 0 : i64, tpu.core_type = #tpu.core_type<tc>, window_params = [{transform_indices = @transform_0, window_bounds = array<i64: 8, 64>}, {pipeline_mode = #tpu.pipeline_mode<synchronous>, transform_indices = @transform_1, window_bounds = array<i64: 64, 32>}, {pipeline_mode = #tpu.pipeline_mode<synchronous>, transform_indices = @transform_2, window_bounds = array<i64: 32, 32>}, {pipeline_mode = #tpu.pipeline_mode<synchronous>, transform_indices = @transform_3, window_bounds = array<i64: 32, 128>}, {pipeline_mode = #tpu.pipeline_mode<synchronous>, transform_indices = @transform_4, window_bounds = array<i64: 3, 128>}, {transform_indices = @transform_5, window_bounds = array<i64: 8, 128>}]} {
    %c0 = arith.constant 0 : index
    %c0_0 = arith.constant 0 : index
    %0 = vector.load %arg1[%c0, %c0_0] : memref<8x64xf32, #tpu.memory_space<vmem>>, vector<8x64xf32>
    %c0_1 = arith.constant 0 : index
    %c0_2 = arith.constant 0 : index
    %1 = vector.load %arg2[%c0_1, %c0_2] : memref<64x32xf32, #tpu.memory_space<vmem>>, vector<64x32xf32>
    %c0_3 = arith.constant 0 : index
    %c0_4 = arith.constant 0 : index
    %2 = vector.load %arg5[%c0_3, %c0_4] : memref<3x128xf32, #tpu.memory_space<vmem>>, vector<1x32xf32>
    %cst = arith.constant dense<0.000000e+00> : vector<8x32xf32>
    %3 = tpu.matmul %0, %1, %cst {dimension_numbers = #tpu.dot_dimension_numbers<[1], [0], [0], [1], [0, 0, 1, 1], [], []>} : vector<8x64xf32>, vector<64x32xf32>, vector<8x32xf32> -> vector<8x32xf32>
    %4 = vector.broadcast %2 : vector<1x32xf32> to vector<8x32xf32>
    %5 = arith.addf %3, %4 : vector<8x32xf32>
    %cst_5 = arith.constant 0.000000e+00 : f32
    %6 = vector.broadcast %cst_5 : f32 to vector<8x32xf32>
    %7 = arith.maximumf %5, %6 : vector<8x32xf32>
    %c0_6 = arith.constant 0 : index
    %c0_7 = arith.constant 0 : index
    %8 = vector.load %arg3[%c0_6, %c0_7] : memref<32x32xf32, #tpu.memory_space<vmem>>, vector<32x32xf32>
    %c1 = arith.constant 1 : index
    %c0_8 = arith.constant 0 : index
    %9 = vector.load %arg5[%c1, %c0_8] : memref<3x128xf32, #tpu.memory_space<vmem>>, vector<1x32xf32>
    %cst_9 = arith.constant dense<0.000000e+00> : vector<8x32xf32>
    %10 = tpu.matmul %7, %8, %cst_9 {dimension_numbers = #tpu.dot_dimension_numbers<[1], [0], [0], [1], [0, 0, 1, 1], [], []>} : vector<8x32xf32>, vector<32x32xf32>, vector<8x32xf32> -> vector<8x32xf32>
    %11 = vector.broadcast %9 : vector<1x32xf32> to vector<8x32xf32>
    %12 = arith.addf %10, %11 : vector<8x32xf32>
    %cst_10 = arith.constant 0.000000e+00 : f32
    %13 = vector.broadcast %cst_10 : f32 to vector<8x32xf32>
    %14 = arith.maximumf %12, %13 : vector<8x32xf32>
    %c0_11 = arith.constant 0 : index
    %c0_12 = arith.constant 0 : index
    %15 = vector.load %arg4[%c0_11, %c0_12] : memref<32x128xf32, #tpu.memory_space<vmem>>, vector<32x128xf32>
    %c2 = arith.constant 2 : index
    %c0_13 = arith.constant 0 : index
    %16 = vector.load %arg5[%c2, %c0_13] : memref<3x128xf32, #tpu.memory_space<vmem>>, vector<1x128xf32>
    %cst_14 = arith.constant dense<0.000000e+00> : vector<8x128xf32>
    %17 = tpu.matmul %14, %15, %cst_14 {dimension_numbers = #tpu.dot_dimension_numbers<[1], [0], [0], [1], [0, 0, 1, 1], [], []>} : vector<8x32xf32>, vector<32x128xf32>, vector<8x128xf32> -> vector<8x128xf32>
    %18 = vector.broadcast %16 : vector<1x128xf32> to vector<8x128xf32>
    %19 = arith.addf %17, %18 : vector<8x128xf32>
    %cst_15 = arith.constant dense<0xFF800000> : vector<8xf32>
    %20 = vector.multi_reduction <maximumf>, %19, %cst_15 [1] : vector<8x128xf32> to vector<8xf32>
    %21 = vector.shape_cast %20 : vector<8xf32> to vector<8x1xf32>
    %22 = vector.broadcast %21 : vector<8x1xf32> to vector<8x128xf32>
    %23 = arith.subf %19, %22 : vector<8x128xf32>
    %24 = math.exp %23 : vector<8x128xf32>
    %cst_16 = arith.constant dense<0.000000e+00> : vector<8xf32>
    %25 = vector.multi_reduction <add>, %24, %cst_16 [1] : vector<8x128xf32> to vector<8xf32>
    %26 = vector.shape_cast %25 : vector<8xf32> to vector<8x1xf32>
    %27 = tpu.reciprocal %26 {approx = true} : vector<8x1xf32> -> vector<8x1xf32>
    %28 = arith.mulf %26, %27 : vector<8x1xf32>
    %cst_17 = arith.constant 2.000000e+00 : f32
    %29 = vector.broadcast %cst_17 : f32 to vector<8x1xf32>
    %30 = arith.subf %29, %28 : vector<8x1xf32>
    %31 = arith.mulf %27, %30 : vector<8x1xf32>
    %32 = vector.broadcast %31 : vector<8x1xf32> to vector<8x128xf32>
    %33 = arith.mulf %24, %32 : vector<8x128xf32>
    %c0_18 = arith.constant 0 : index
    %c0_19 = arith.constant 0 : index
    %34 = vector.load %arg6[%c0_18, %c0_19] : memref<8x128xf32, #tpu.memory_space<vmem>>, vector<8x128xf32>
    tpu.vector_store %arg6[%c0_18, %c0_19], %33 {strides = array<i32>} : memref<8x128xf32, #tpu.memory_space<vmem>>, vector<8x128xf32>,
    return
  }
  func.func @transform_0(%arg0: i32) -> (i32, i32) {
    %c0_i32 = arith.constant 0 : i32
    %c0_i32_0 = arith.constant 0 : i32
    return %arg0, %c0_i32 : i32, i32
  }
  func.func @transform_1(%arg0: i32) -> (i32, i32) {
    %c0_i32 = arith.constant 0 : i32
    %c0_i32_0 = arith.constant 0 : i32
    %c0_i32_1 = arith.constant 0 : i32
    return %c0_i32, %c0_i32_0 : i32, i32
  }
  func.func @transform_2(%arg0: i32) -> (i32, i32) {
    %c0_i32 = arith.constant 0 : i32
    %c0_i32_0 = arith.constant 0 : i32
    %c0_i32_1 = arith.constant 0 : i32
    return %c0_i32, %c0_i32_0 : i32, i32
  }
  func.func @transform_3(%arg0: i32) -> (i32, i32) {
    %c0_i32 = arith.constant 0 : i32
    %c0_i32_0 = arith.constant 0 : i32
    %c0_i32_1 = arith.constant 0 : i32
    return %c0_i32, %c0_i32_0 : i32, i32
  }
  func.func @transform_4(%arg0: i32) -> (i32, i32) {
    %c0_i32 = arith.constant 0 : i32
    %c0_i32_0 = arith.constant 0 : i32
    %c0_i32_1 = arith.constant 0 : i32
    return %c0_i32, %c0_i32_0 : i32, i32
  }
  func.func @transform_5(%arg0: i32) -> (i32, i32) {
    %c0_i32 = arith.constant 0 : i32
    %c0_i32_0 = arith.constant 0 : i32
    return %arg0, %c0_i32 : i32, i32
  }
}

</mosaic_0001>

<llo_original>
// kernel: _forward_impl.1
$region0: #{_forward_impl.1}
  #allocation0 [shape = 'u32[]', space=smem, size = 0x4, offset = 0x4, fixed_abs, tag = 'smem constant byte address 0x4 - core index']
  #allocation1 [shape = 'u32[144,128]{1,0:T(1,128)}', space=vmem, size = 0x12000, scoped, tag = 'internal scratch']
  %s0 = inlined_call_operand.vmem [shape: f32[8,64], index: 0, kind: input, shape index: {}]
  %s1 = inlined_call_operand.hbm [shape: f32[64,32], index: 1, kind: input, shape index: {}]
  %s2 = inlined_call_operand.hbm [shape: f32[32,32], index: 2, kind: input, shape index: {}]
  %s3 = inlined_call_operand.vmem [shape: f32[32,128], index: 3, kind: input, shape index: {}]
  %s4 = inlined_call_operand.vmem [shape: f32[3,128], index: 4, kind: input, shape index: {}]
  %s5 = inlined_call_operand.vmem [shape: f32[8,128], index: 5, kind: output, shape index: {}]
  %s6 = sld [smem:[#allocation0]]
  $region38: #{_forward_impl.1} parent=0
    _
  %s8 = ssub.s32 1, %s6
  %s9 = scalar_select 0, %s8, %s6
  $region1: #{_forward_impl.1} parent=0
    #allocation2 [shape = 'u8[32768]{0}', space=vmem, size = 0x8000, scoped, tag = 'input window, operand 1, single buffered']
    #allocation3 [shape = 's32[1]{0}', space=sflag, size = 0x4, scoped, tag = 'scoped memory for _forward_impl.1']
    #allocation4 [shape = 'u8[16384]{0}', space=vmem, size = 0x4000, scoped, tag = 'input window, operand 2, single buffered']
    #allocation5 [shape = 's32[1]{0}', space=sflag, size = 0x4, scoped, tag = 'scoped memory for _forward_impl.1']
    %10 = vsyncpa [#allocation3], 0
    %11 = vsyncpa [#allocation5], 0
    // Predicated region
    $region2: #{_forward_impl.1} parent=1 // pred_check
      _
    $region3: #{_forward_impl.1} parent=1 // pred_check_branch
      %13 = sbr.rel (0) target = $region5
    $region4: #{_forward_impl.1} parent=1 // pred_region
      _
    $region5: #{_forward_impl.1} parent=1 // pred_fallthru
      _
    // Predicated region
    $region6: #{_forward_impl.1} parent=1 // pred_check
      _
    $region7: #{_forward_impl.1} parent=1 // pred_check_branch
      %15 = sbr.rel (0) target = $region9
    $region8: #{_forward_impl.1} parent=1 // pred_region
      %s17 = ssub.s32 1024, 1024
      %18 = vsyncadd [#allocation3], %s17
      %s19 = sshll.u32 [#allocation2], 4
      %s20 = int_to_ptr.vmem [resolvable:$true] %s19
      %25 = dma.hbm_to_vmem [thread:$0]  %s1, 1024, %s20, [#allocation3], 128, 128, 8
    $region9: #{_forward_impl.1} parent=1 // pred_fallthru
      _
    // Predicated region
    $region10: #{_forward_impl.1} parent=1 // pred_check
      _
    $region11: #{_forward_impl.1} parent=1 // pred_check_branch
      %27 = sbr.rel (0) target = $region13
    $region12: #{_forward_impl.1} parent=1 // pred_region
      %s29 = ssub.s32 512, 512
      %30 = vsyncadd [#allocation5], %s29
      %s31 = sshll.u32 [#allocation4], 4
      %s32 = int_to_ptr.vmem [resolvable:$true] %s31
      %37 = dma.hbm_to_vmem [thread:$0]  %s2, 512, %s32, [#allocation5], 128, 128, 8
    $region13: #{_forward_impl.1} parent=1 // pred_fallthru
      _
    // Predicated region
    $region14: #{_forward_impl.1} parent=1 // pred_check
      _
    $region15: #{_forward_impl.1} parent=1 // pred_check_branch
      %39 = sbr.rel (0) target = $region17
    $region16: #{_forward_impl.1} parent=1 // pred_region
      _
    $region17: #{_forward_impl.1} parent=1 // pred_fallthru
      _
    // Predicated region
    $region18: #{_forward_impl.1} parent=1 // pred_check
      _
    $region19: #{_forward_impl.1} parent=1 // pred_check_branch
      %41 = sbr.rel (0) target = $region21
    $region20: #{_forward_impl.1} parent=1 // pred_region
      _
    $region21: #{_forward_impl.1} parent=1 // pred_fallthru
      _
    // Predicated region
    $region22: #{_forward_impl.1} parent=1 // pred_check
      _
    $region23: #{_forward_impl.1} parent=1 // pred_check_branch
      %43 = sbr.rel (0) target = $region25
    $region24: #{_forward_impl.1} parent=1 // pred_region
      %44 = dma.done [#allocation3], 1024
    $region25: #{_forward_impl.1} parent=1 // pred_fallthru
      _
    // Predicated region
    $region26: #{_forward_impl.1} parent=1 // pred_check
      _
    $region27: #{_forward_impl.1} parent=1 // pred_check_branch
      %46 = sbr.rel (0) target = $region29
    $region28: #{_forward_impl.1} parent=1 // pred_region
      %47 = dma.done [#allocation5], 512
    $region29: #{_forward_impl.1} parent=1 // pred_fallthru
      _
    %v48 = vld [vmem:[%s0] sm:$0xff]
    %v49 = vld [vmem:[#allocation2] sm:$0xff]
    %v50 = vld [vmem:[#allocation2 + $0x8] sm:$0xff]
    %v51 = vld [vmem:[#allocation2 + $0x10] sm:$0xff]
    %v52 = vld [vmem:[#allocation2 + $0x18] sm:$0xff]
    %v53 = vld [vmem:[#allocation2 + $0x20] sm:$0xff]
    %v54 = vld [vmem:[#allocation2 + $0x28] sm:$0xff]
    %v55 = vld [vmem:[#allocation2 + $0x30] sm:$0xff]
    %v56 = vld [vmem:[#allocation2 + $0x38] sm:$0xff]
    %v57 = vld [vmem:[%s4] sm:$0x1]
    %v58 = vlaneseq
    %v59 = vshrl.u32 %v58, 7
    %v60 = vsub.s32 0, %v59
    %v61 = vrot.slane %v57, %v60
    %vm62 = vcmask 523264
    %v64 = vsel %vm62, %v48, 0
    %66 = vmatprep.subr.mxu0 0.0
    %67 = vmatpush1.msra.mxu0 %v49
    %68 = vmatprep.subr.mxu0 0.0
    %69 = vmatpush1.msra.mxu0 %v50
    %70 = vmatprep.subr.mxu0 0.0
    %71 = vmatpush1.msra.mxu0 %v51
    %72 = vmatprep.subr.mxu0 0.0
    %73 = vmatpush1.msra.mxu0 %v52
    %74 = vmatprep.subr.mxu0 0.0
    %75 = vmatpush1.msra.mxu0 %v53
    %76 = vmatprep.subr.mxu0 0.0
    %77 = vmatpush1.msra.mxu0 %v54
    %78 = vmatprep.subr.mxu0 0.0
    %79 = vmatpush1.msra.mxu0 %v55
    %80 = vmatprep.subr.mxu0 0.0
    %81 = vmatpush1.msra.mxu0 %v56
    %82 = vmatprep.subr.mxu0 0.0
    %83 = vmatpush1.msra.mxu0 0.0
    %84 = vmatprep.subr.mxu0 0.0
    %85 = vmatpush1.msra.mxu0 0.0
    %86 = vmatprep.subr.mxu0 0.0
    %87 = vmatpush1.msra.mxu0 0.0
    %88 = vmatprep.subr.mxu0 0.0
    %89 = vmatpush1.msra.mxu0 0.0
    %90 = vmatprep.subr.mxu0 0.0
    %91 = vmatpush1.msra.mxu0 0.0
    %92 = vmatprep.subr.mxu0 0.0
    %93 = vmatpush1.msra.mxu0 0.0
    %94 = vmatprep.subr.mxu0 0.0
    %95 = vmatpush1.msra.mxu0 0.0
    %96 = vmatprep.subr.mxu0 0.0
    %97 = vmatpush1.msra.mxu0 0.0
    %98 = vmatprep.subr.mxu0 0.0
    %99 = vmatpush1.msra.mxu0 0.0
    %100 = vmatprep.subr.mxu0 0.0
    %101 = vmatpush1.msra.mxu0 0.0
    %102 = vmatprep.subr.mxu0 0.0
    %103 = vmatpush1.msra.mxu0 0.0
    %104 = vmatprep.subr.mxu0 0.0
    %105 = vmatpush1.msra.mxu0 0.0
    %106 = vmatprep.subr.mxu0 0.0
    %107 = vmatpush1.msra.mxu0 0.0
    %108 = vmatprep.subr.mxu0 0.0
    %109 = vmatpush1.msra.mxu0 0.0
    %110 = vmatprep.subr.mxu0 0.0
    %111 = vmatpush1.msra.mxu0 0.0
    %112 = vmatprep.subr.mxu0 0.0
    %113 = vmatpush1.msra.mxu0 0.0
    %114 = vmatprep.subr.mxu0 0.0
    %115 = vmatpush1.msra.mxu0 0.0
    %116 = vmatprep.subr.mxu0 0.0
    %117 = vmatpush1.msra.mxu0 0.0
    %118 = vmatprep.subr.mxu0 0.0
    %119 = vmatpush1.msra.mxu0 0.0
    %120 = vmatprep.subr.mxu0 0.0
    %121 = vmatpush1.msra.mxu0 0.0
    %122 = vmatprep.subr.mxu0 0.0
    %123 = vmatpush1.msra.mxu0 0.0
    %124 = vmatprep.subr.mxu0 0.0
    %125 = vmatpush1.msra.mxu0 0.0
    %126 = vmatprep.subr.mxu0 0.0
    %127 = vmatpush1.msra.mxu0 0.0
    %128 = vmatprep.subr.mxu0 0.0
    %129 = vmatpush1.msra.mxu0 0.0
    %130 = vmatprep.mubr.f32.mxu0 0.0
    %131 = vmatmul.mubr.f32.gmra.mrb[0].mxu0 %v64
    %v132 = vpop.f32.mrb[0].mxu0
    %v133 = vadd.f32 %v61, %v132
    %v134 = vpop.f32.mrb[0].mxu0
    %135 = vdwg.mxu0
    %v136 = vmax.f32 %v133, 0.0
    %v137 = vld [vmem:[#allocation4] sm:$0xff]
    %v138 = vld [vmem:[#allocation4 + $0x8] sm:$0xff]
    %v139 = vld [vmem:[#allocation4 + $0x10] sm:$0xff]
    %v140 = vld [vmem:[#allocation4 + $0x18] sm:$0xff]
    %v141 = vld [vmem:[%s4 + $0x1] sm:$0x1]
    %v142 = vlaneseq
    %v143 = vshrl.u32 %v142, 7
    %v144 = vsub.s32 0, %v143
    %v145 = vrot.slane %v141, %v144
    %vm146 = vcmask 261120
    %v148 = vsel %vm146, %v136, 0
    %150 = vmatprep.subr.mxu0 0.0
    %151 = vmatpush1.msra.mxu0 %v137
    %152 = vmatprep.subr.mxu0 0.0
    %153 = vmatpush1.msra.mxu0 %v138
    %154 = vmatprep.subr.mxu0 0.0
    %155 = vmatpush1.msra.mxu0 %v139
    %156 = vmatprep.subr.mxu0 0.0
    %157 = vmatpush1.msra.mxu0 %v140
    %158 = vmatprep.subr.mxu0 0.0
    %159 = vmatpush1.msra.mxu0 0.0
    %160 = vmatprep.subr.mxu0 0.0
    %161 = vmatpush1.msra.mxu0 0.0
    %162 = vmatprep.subr.mxu0 0.0
    %163 = vmatpush1.msra.mxu0 0.0
    %164 = vmatprep.subr.mxu0 0.0
    %165 = vmatpush1.msra.mxu0 0.0
    %166 = vmatprep.subr.mxu0 0.0
    %167 = vmatpush1.msra.mxu0 0.0
    %168 = vmatprep.subr.mxu0 0.0
    %169 = vmatpush1.msra.mxu0 0.0
    %170 = vmatprep.subr.mxu0 0.0
    %171 = vmatpush1.msra.mxu0 0.0
    %172 = vmatprep.subr.mxu0 0.0
    %173 = vmatpush1.msra.mxu0 0.0
    %174 = vmatprep.subr.mxu0 0.0
    %175 = vmatpush1.msra.mxu0 0.0
    %176 = vmatprep.subr.mxu0 0.0
    %177 = vmatpush1.msra.mxu0 0.0
    %178 = vmatprep.subr.mxu0 0.0
    %179 = vmatpush1.msra.mxu0 0.0
    %180 = vmatprep.subr.mxu0 0.0
    %181 = vmatpush1.msra.mxu0 0.0
    %182 = vmatprep.subr.mxu0 0.0
    %183 = vmatpush1.msra.mxu0 0.0
    %184 = vmatprep.subr.mxu0 0.0
    %185 = vmatpush1.msra.mxu0 0.0
    %186 = vmatprep.subr.mxu0 0.0
    %187 = vmatpush1.msra.mxu0 0.0
    %188 = vmatprep.subr.mxu0 0.0
    %189 = vmatpush1.msra.mxu0 0.0
    %190 = vmatprep.subr.mxu0 0.0
    %191 = vmatpush1.msra.mxu0 0.0
    %192 = vmatprep.subr.mxu0 0.0
    %193 = vmatpush1.msra.mxu0 0.0
    %194 = vmatprep.subr.mxu0 0.0
    %195 = vmatpush1.msra.mxu0 0.0
    %196 = vmatprep.subr.mxu0 0.0
    %197 = vmatpush1.msra.mxu0 0.0
    %198 = vmatprep.subr.mxu0 0.0
    %199 = vmatpush1.msra.mxu0 0.0
    %200 = vmatprep.subr.mxu0 0.0
    %201 = vmatpush1.msra.mxu0 0.0
    %202 = vmatprep.subr.mxu0 0.0
    %203 = vmatpush1.msra.mxu0 0.0
    %204 = vmatprep.subr.mxu0 0.0
    %205 = vmatpush1.msra.mxu0 0.0
    %206 = vmatprep.subr.mxu0 0.0
    %207 = vmatpush1.msra.mxu0 0.0
    %208 = vmatprep.subr.mxu0 0.0
    %209 = vmatpush1.msra.mxu0 0.0
    %210 = vmatprep.subr.mxu0 0.0
    %211 = vmatpush1.msra.mxu0 0.0
    %212 = vmatprep.subr.mxu0 0.0
    %213 = vmatpush1.msra.mxu0 0.0
    %214 = vmatprep.mubr.f32.mxu0 0.0
    %215 = vmatmul.mubr.f32.gmra.mrb[0].mxu0 %v148
    %v216 = vpop.f32.mrb[0].mxu0
    %v217 = vadd.f32 %v145, %v216
    %v218 = vpop.f32.mrb[0].mxu0
    %219 = vdwg.mxu0
    %v220 = vmax.f32 %v217, 0.0
    %v221 = vld [vmem:[%s3] sm:$0xff]
    %v222 = vld [vmem:[%s3 + $0x8] sm:$0xff]
    %v223 = vld [vmem:[%s3 + $0x10] sm:$0xff]
    %v224 = vld [vmem:[%s3 + $0x18] sm:$0xff]
    %v225 = vld [vmem:[%s4 + $0x2] sm:$0x1]
    %v226 = vlaneseq
    %v227 = vshrl.u32 %v226, 7
    %v228 = vsub.s32 0, %v227
    %v229 = vrot.slane %v225, %v228
    %v231 = vsel %vm146, %v220, 0
    %233 = vmatprep.subr.mxu0 0.0
    %234 = vmatpush1.msra.mxu0 %v221
    %235 = vmatprep.subr.mxu0 0.0
    %236 = vmatpush1.msra.mxu0 %v222
    %237 = vmatprep.subr.mxu0 0.0
    %238 = vmatpush1.msra.mxu0 %v223
    %239 = vmatprep.subr.mxu0 0.0
    %240 = vmatpush1.msra.mxu0 %v224
    %241 = vmatprep.subr.mxu0 0.0
    %242 = vmatpush1.msra.mxu0 0.0
    %243 = vmatprep.subr.mxu0 0.0
    %244 = vmatpush1.msra.mxu0 0.0
    %245 = vmatprep.subr.mxu0 0.0
    %246 = vmatpush1.msra.mxu0 0.0
    %247 = vmatprep.subr.mxu0 0.0
    %248 = vmatpush1.msra.mxu0 0.0
    %249 = vmatprep.subr.mxu0 0.0
    %250 = vmatpush1.msra.mxu0 0.0
    %251 = vmatprep.subr.mxu0 0.0
    %252 = vmatpush1.msra.mxu0 0.0
    %253 = vmatprep.subr.mxu0 0.0
    %254 = vmatpush1.msra.mxu0 0.0
    %255 = vmatprep.subr.mxu0 0.0
    %256 = vmatpush1.msra.mxu0 0.0
    %257 = vmatprep.subr.mxu0 0.0
    %258 = vmatpush1.msra.mxu0 0.0
    %259 = vmatprep.subr.mxu0 0.0
    %260 = vmatpush1.msra.mxu0 0.0
    %261 = vmatprep.subr.mxu0 0.0
    %262 = vmatpush1.msra.mxu0 0.0
    %263 = vmatprep.subr.mxu0 0.0
    %264 = vmatpush1.msra.mxu0 0.0
    %265 = vmatprep.subr.mxu0 0.0
    %266 = vmatpush1.msra.mxu0 0.0
    %267 = vmatprep.subr.mxu0 0.0
    %268 = vmatpush1.msra.mxu0 0.0
    %269 = vmatprep.subr.mxu0 0.0
    %270 = vmatpush1.msra.mxu0 0.0
    %271 = vmatprep.subr.mxu0 0.0
    %272 = vmatpush1.msra.mxu0 0.0
    %273 = vmatprep.subr.mxu0 0.0
    %274 = vmatpush1.msra.mxu0 0.0
    %275 = vmatprep.subr.mxu0 0.0
    %276 = vmatpush1.msra.mxu0 0.0
    %277 = vmatprep.subr.mxu0 0.0
    %278 = vmatpush1.msra.mxu0 0.0
    %279 = vmatprep.subr.mxu0 0.0
    %280 = vmatpush1.msra.mxu0 0.0
    %281 = vmatprep.subr.mxu0 0.0
    %282 = vmatpush1.msra.mxu0 0.0
    %283 = vmatprep.subr.mxu0 0.0
    %284 = vmatpush1.msra.mxu0 0.0
    %285 = vmatprep.subr.mxu0 0.0
    %286 = vmatpush1.msra.mxu0 0.0
    %287 = vmatprep.subr.mxu0 0.0
    %288 = vmatpush1.msra.mxu0 0.0
    %289 = vmatprep.subr.mxu0 0.0
    %290 = vmatpush1.msra.mxu0 0.0
    %291 = vmatprep.subr.mxu0 0.0
    %292 = vmatpush1.msra.mxu0 0.0
    %293 = vmatprep.subr.mxu0 0.0
    %294 = vmatpush1.msra.mxu0 0.0
    %295 = vmatprep.subr.mxu0 0.0
    %296 = vmatpush1.msra.mxu0 0.0
    %297 = vmatprep.mubr.f32.mxu0 0.0
    %298 = vmatmul.mubr.f32.gmra.mrb[0].mxu0 %v231
    %v299 = vpop.f32.mrb[0].mxu0
    %v300 = vadd.f32 %v229, %v299
    %v301 = vpop.f32.mrb[0].mxu0
    %302 = vdwg.mxu0
    %303 = vmax.xlane.f32.xlu0 %v300
    %v304 = vpop.xlane.xlu0 %303
    %v305 = vsub.f32 %v300, %v304
    %v306 = vmul.f32 %v305, 1.442695
    %v307 = vpow.pop %v306
    %308 = vadd.xlane.f32.xlu0 %v307
    %v309 = vpop.xlane.xlu0 %308
    %v310 = vrcp.pop %v309
    %v311 = vmul.f32 %v309, %v310
    %v312 = vsub.f32 2.0, %v311
    %v313 = vmul.f32 %v310, %v312
    %v314 = vmul.f32 %v307, %v313
    %315 = vst [vmem:[%s5] sm:$0xff] %v314
    // Predicated region
    $region30: #{_forward_impl.1} parent=1 // pred_check
      _
    $region31: #{_forward_impl.1} parent=1 // pred_check_branch
      %317 = sbr.rel (0) target = $region33
    $region32: #{_forward_impl.1} parent=1 // pred_region
      _
    $region33: #{_forward_impl.1} parent=1 // pred_fallthru
      _
    // Predicated region
    $region34: #{_forward_impl.1} parent=1 // pred_check
      _
    $region35: #{_forward_impl.1} parent=1 // pred_check_branch
      %319 = sbr.rel (0) target = $region37
    $region36: #{_forward_impl.1} parent=1 // pred_region
      _
    $region37: #{_forward_impl.1} parent=1 // pred_fallthru
      _
    %320 = vsyncpa [#allocation3], 1
    %321 = vsyncpa [#allocation5], 1

</llo_original>
